<compile_context>
chip_gen: v5e
topology: v5e:2x2
jax: 0.10.0
libtpu: 0.0.40
codegen_flags: <defaults>
</compile_context>

<pallas_src>
import jax
import jax.numpy as jnp
from jax import lax
from jax.experimental import pallas as pl
from jax.experimental.pallas import tpu as pltpu

LANES = 128
CHUNK_ROWS = 256                 # in-kernel working set: 256*128*4B = 128 KiB f32 per value
MULTI_STEP_BYTES = 2 << 20       # inputs bigger than this always get >= 2 grid steps
DEFAULT_BLOCK_BYTES = 8 << 20    # ~8 MiB per block -> step overhead ~2-6% of roofline
VMEM_HEADROOM = 8 << 20          # slack for spills / compiler scratch


def _exp_dive_kernel(x_ref, o_ref):
    """out = exp(x) - exp(-x), f32 compute, chunked over rows so the upcast /
    exp intermediates never materialize a full-block f32 temporary."""
    rows = x_ref.shape[0]

    def do(r, nrows):
        x = x_ref[pl.ds(r, nrows), :].astype(jnp.float32)
        # Two EUP exps (not exp + exact reciprocal): matches the PyTorch
        # reference bit-for-bit (incl. underflow at large |x|) and keeps the
        # transcendental work in the otherwise-idle EUP slot.
        o_ref[pl.ds(r, nrows), :] = (jnp.exp(x) - jnp.exp(-x)).astype(o_ref.dtype)

    if rows <= CHUNK_ROWS:
        do(0, rows)
    else:
        n_chunks, rem = divmod(rows, CHUNK_ROWS)

        def body(i, carry):
            do(pl.multiple_of(i * CHUNK_ROWS, CHUNK_ROWS), CHUNK_ROWS)
            return carry

        lax.fori_loop(0, n_chunks, body, 0)
        if rem > 0:
            do(n_chunks * CHUNK_ROWS, rem)


def _vmem_limit_bytes():
    try:
        cap = pltpu.get_tpu_info().vmem_capacity_bytes
    except Exception:
        cap = 128 << 20
    # ~half of physical VMEM: 64 MiB on v5e/v6e (128 MiB phys), 48 MiB on v7x (64 MiB phys).
    return (48 << 20) if cap <= (64 << 20) else (64 << 20)


def _row_tile(rows, itemsize, sublane, block_bytes):
    row_bytes = LANES * itemsize
    cap = max(sublane, block_bytes // row_bytes)
    if rows * row_bytes > MULTI_STEP_BYTES:
        # Guarantee >= 2 grid steps: lets ("parallel",) shard across both v7x
        # TensorCores and keeps the DMA-in / compute / DMA-out pipeline busy.
        cap = min(cap, pl.cdiv(rows, 2))
    if rows <= cap:
        return rows                       # full-extent block (exempt from (8,128) rule)
    tr = max(sublane, (cap // sublane) * sublane)
    if tr >= CHUNK_ROWS:
        tr = (tr // CHUNK_ROWS) * CHUNK_ROWS   # keep the in-kernel chunk loop exact
    return tr


def _exp_dive_slab(slab, target_block_bytes):
    rows, _ = slab.shape
    dtype = slab.dtype
    itemsize = jnp.dtype(dtype).itemsize
    sublane = 8 * max(1, 4 // itemsize)       # 8 for f32, 16 for bf16
    vmem_limit = _vmem_limit_bytes()
    # Double-buffered in + out = 4x block bytes; keep headroom for spills.
    block_bytes = max(sublane * LANES * itemsize,
                      min(target_block_bytes, (vmem_limit - VMEM_HEADROOM) // 4))
    tr = _row_tile(rows, itemsize, sublane, block_bytes)
    grid = (pl.cdiv(rows, tr),)
    return pl.pallas_call(
        _exp_dive_kernel,
        out_shape=jax.ShapeDtypeStruct((rows, LANES), dtype),
        grid_spec=pltpu.PrefetchScalarGridSpec(
            num_scalar_prefetch=0,
            grid=grid,
            in_specs=[pl.BlockSpec((tr, LANES), lambda i: (i, 0))],
            out_specs=pl.BlockSpec((tr, LANES), lambda i: (i, 0)),
        ),
        compiler_params=pltpu.CompilerParams(
            dimension_semantics=("parallel",),
            vmem_limit_bytes=vmem_limit,
        ),
    )(slab)


def _exp_dive_xla(x):
    # Tiny (<128-element) tails only: plain XLA, f32 compute for consistency.
    x32 = x.astype(jnp.float32)
    return (jnp.exp(x32) - jnp.exp(-x32)).astype(x.dtype)


def exp_dive(x, *, target_block_bytes=DEFAULT_BLOCK_BYTES):
    """Elementwise exp(x) - exp(-x) via a Pallas TPU kernel (any shape, float dtype)."""
    orig_shape, orig_dtype = x.shape, x.dtype
    n = x.size
    if n == 0:
        return x

    flat = x.reshape(-1)                       # zero-copy for contiguous inputs
    bulk_rows = n // LANES
    tail = n - bulk_rows * LANES

    if bulk_rows == 0:
        # Fewer than 128 elements: not worth a kernel launch.
        return _exp_dive_xla(flat).reshape(orig_shape)

    if tail == 0:
        slab = flat.reshape(bulk_rows, LANES)  # zero-copy reshape, lane-dense
        return _exp_dive_slab(slab, target_block_bytes).reshape(orig_shape)

    # n % 128 != 0: kernel on the 128-aligned bulk, trivial XLA epilogue on the
    # <128-element tail. Avoids whole-array pad + un-pad passes.
    split = bulk_rows * LANES
    bulk = flat[:split].reshape(bulk_rows, LANES)
    out_bulk = _exp_dive_slab(bulk, target_block_bytes).reshape(-1)
    out_tail = _exp_dive_xla(flat[split:])
    return jnp.concatenate([out_bulk, out_tail]).reshape(orig_shape).astype(orig_dtype)


if __name__ == "__main__":
    key = jax.random.PRNGKey(0)
    k0, k1, k2, k3, k4 = jax.random.split(key, 5)

    def ref(v):
        return jnp.exp(v) - jnp.exp(-v)

    # 1) NCHW-style f32, size multiple of 128 (fast single-block path).
    x1 = jax.random.normal(k0, (2, 4, 16, 16), dtype=jnp.float32)
    y1 = jax.block_until_ready(exp_dive(x1))
    assert y1.shape == x1.shape and y1.dtype == x1.dtype
    assert jnp.allclose(y1, ref(x1), atol=1e-5, rtol=1e-5)

    # 2) n % 128 != 0 with a 128-aligned bulk + <128-element tail.
    x2 = jax.random.normal(k1, (3, 5, 100), dtype=jnp.float32)
    y2 = jax.block_until_ready(exp_dive(x2))
    assert y2.shape == x2.shape and y2.dtype == x2.dtype
    assert jnp.allclose(y2, ref(x2), atol=1e-5, rtol=1e-5)

    # 3) Tiny input (< 128 elements): pure XLA epilogue path.
    x3 = jax.random.normal(k2, (3, 5, 7), dtype=jnp.float32)
    y3 = jax.block_until_ready(exp_dive(x3))
    assert y3.shape == x3.shape and y3.dtype == x3.dtype
    assert jnp.allclose(y3, ref(x3), atol=1e-5, rtol=1e-5)

    # 4) bf16 input (f32 compute in-kernel, bf16 store).
    x4 = jax.random.normal(k3, (2, 4, 16, 16), dtype=jnp.bfloat16)
    y4 = jax.block_until_ready(exp_dive(x4))
    assert y4.shape == x4.shape and y4.dtype == x4.dtype
    assert jnp.allclose(y4.astype(jnp.float32), ref(x4.astype(jnp.float32)),
                        atol=2e-2, rtol=2e-2)

    # 5) Multi-block grid with a partial last block + in-kernel row chunking
    #    (forced by a small block size so the test stays small and fast).
    x5 = jax.random.normal(k4, (2, 4, 72, 64), dtype=jnp.float32)   # 288 rows of 128 lanes
    y5 = jax.block_until_ready(exp_dive(x5, target_block_bytes=128 * 1024))
    assert y5.shape == x5.shape and y5.dtype == x5.dtype
    assert jnp.allclose(y5, ref(x5), atol=1e-5, rtol=1e-5)

    print("KERNEL_OK")
</pallas_src>

<mosaic_0001>
module attributes {stable_mosaic.version = 11 : i64} {
  func.func @_exp_dive_kernel(%arg0: i32, %arg1: memref<16x128xf32, #tpu.memory_space<vmem>>, %arg2: memref<16x128xf32, #tpu.memory_space<vmem>>) attributes {dimension_semantics = [#tpu.dimension_semantics<parallel>], iteration_bounds = array<i64: 1>, scalar_prefetch = 0 : i64, scratch_operands = 0 : i64, tpu.core_type = #tpu.core_type<tc>, window_params = [{transform_indices = @transform_0, window_bounds = array<i64: 16, 128>}, {transform_indices = @transform_1, window_bounds = array<i64: 16, 128>}]} {
    %c0 = arith.constant 0 : index
    %c0_0 = arith.constant 0 : index
    %0 = vector.load %arg1[%c0, %c0_0] : memref<16x128xf32, #tpu.memory_space<vmem>>, vector<16x128xf32>
    %1 = math.exp %0 : vector<16x128xf32>
    %cst = arith.constant 0.000000e+00 : f32
    %2 = vector.broadcast %cst : f32 to vector<16x128xf32>
    %3 = arith.subf %2, %0 : vector<16x128xf32>
    %4 = math.exp %3 : vector<16x128xf32>
    %5 = arith.subf %1, %4 : vector<16x128xf32>
    %c0_1 = arith.constant 0 : index
    %c0_2 = arith.constant 0 : index
    %6 = vector.load %arg2[%c0_1, %c0_2] : memref<16x128xf32, #tpu.memory_space<vmem>>, vector<16x128xf32>
    tpu.vector_store %arg2[%c0_1, %c0_2], %5 {strides = array<i32>} : memref<16x128xf32, #tpu.memory_space<vmem>>, vector<16x128xf32>,
    return
  }
  func.func @transform_0(%arg0: i32) -> (i32, i32) {
    %c0_i32 = arith.constant 0 : i32
    %c0_i32_0 = arith.constant 0 : i32
    return %arg0, %c0_i32 : i32, i32
  }
  func.func @transform_1(%arg0: i32) -> (i32, i32) {
    %c0_i32 = arith.constant 0 : i32
    %c0_i32_0 = arith.constant 0 : i32
    return %arg0, %c0_i32 : i32, i32
  }
}

</mosaic_0001>

<llo_original>
// kernel: tpu_custom_call.1
$region0: #{tpu_custom_call.1}
  #allocation0 [shape = 'u32[]', space=smem, size = 0x4, offset = 0x4, fixed_abs, tag = 'smem constant byte address 0x4 - core index']
  #allocation1 [shape = 'u32[72,128]{1,0:T(1,128)}', space=vmem, size = 0x9000, scoped, tag = 'internal scratch']
  %s0 = inlined_call_operand.hbm [shape: f32[16,128], index: 0, kind: input, shape index: {}]
  %s1 = inlined_call_operand.hbm [shape: f32[16,128], index: 1, kind: output, shape index: {}]
  %s2 = sld [smem:[#allocation0]]
  $region18: #{tpu_custom_call.1} parent=0
    _
  %s4 = ssub.s32 1, %s2
  %s5 = scalar_select 0, %s4, %s2
  $region1: #{tpu_custom_call.1} parent=0
    #allocation2 [shape = 'u8[8192]{0}', space=vmem, size = 0x2000, scoped, tag = 'input window, operand 0, single buffered']
    #allocation3 [shape = 's32[1]{0}', space=sflag, size = 0x4, scoped, tag = 'scoped memory for tpu_custom_call.1']
    #allocation4 [shape = 's32[1]{0}', space=sflag, size = 0x4, scoped, tag = 'scoped memory for tpu_custom_call.1']
    #allocation5 [shape = 'u8[8192]{0}', space=vmem, size = 0x2000, scoped, tag = 'output window, operand 0, single buffered']
    %6 = vsyncpa [#allocation3], 0
    %7 = vsyncpa [#allocation4], 0
    // Predicated region
    $region2: #{tpu_custom_call.1} parent=1 // pred_check
      _
    $region3: #{tpu_custom_call.1} parent=1 // pred_check_branch
      %9 = sbr.rel (0) target = $region5
    $region4: #{tpu_custom_call.1} parent=1 // pred_region
      %11 = vsyncadd [#allocation3], 0
      %s12 = sshll.u32 %s0, 4
      %s13 = int_to_ptr.hbm [resolvable:$true] %s12
      %s14 = sshll.u32 [#allocation2], 4
      %s15 = int_to_ptr.vmem [resolvable:$true] %s14
      %20 = dma.hbm_to_vmem [thread:$0]  %s13, 256, %s15, [#allocation3], 128, 128, 8
    $region5: #{tpu_custom_call.1} parent=1 // pred_fallthru
      _
    // Predicated region
    $region6: #{tpu_custom_call.1} parent=1 // pred_check
      _
    $region7: #{tpu_custom_call.1} parent=1 // pred_check_branch
      %22 = sbr.rel (0) target = $region9
    $region8: #{tpu_custom_call.1} parent=1 // pred_region
      %24 = dma.done [#allocation3], 256
    $region9: #{tpu_custom_call.1} parent=1 // pred_fallthru
      _
    %v25 = vld [vmem:[#allocation2] sm:$0xff]
    %v26 = vld [vmem:[#allocation2 + $0x8] sm:$0xff]
    %v27 = vmul.f32 %v25, 1.442695
    %v28 = vpow.pop %v27
    %v29 = vmul.f32 %v26, 1.442695
    %v30 = vpow.pop %v29
    %v31 = vsub.f32 0.0, %v25
    %v32 = vsub.f32 0.0, %v26
    %v33 = vmul.f32 %v31, 1.442695
    %v34 = vpow.pop %v33
    %v35 = vmul.f32 %v32, 1.442695
    %v36 = vpow.pop %v35
    %v37 = vsub.f32 %v28, %v34
    %v38 = vsub.f32 %v30, %v36
    %39 = vst [vmem:[#allocation5] sm:$0xff] %v37
    %40 = vst [vmem:[#allocation5 + $0x8] sm:$0xff] %v38
    // Predicated region
    $region10: #{tpu_custom_call.1} parent=1 // pred_check
      _
    $region11: #{tpu_custom_call.1} parent=1 // pred_check_branch
      %42 = sbr.rel (0) target = $region13
    $region12: #{tpu_custom_call.1} parent=1 // pred_region
      %44 = vsyncadd [#allocation4], 0
      %s45 = sshll.u32 [#allocation5], 4
      %s46 = int_to_ptr.vmem [resolvable:$true] %s45
      %s47 = sshll.u32 %s1, 4
      %s48 = int_to_ptr.hbm [resolvable:$true] %s47
      %53 = dma.vmem_to_hbm [thread:$0]  %s46, 256, %s48, [#allocation4], 128, 128, 8
    $region13: #{tpu_custom_call.1} parent=1 // pred_fallthru
      _
    // Predicated region
    $region14: #{tpu_custom_call.1} parent=1 // pred_check
      _
    $region15: #{tpu_custom_call.1} parent=1 // pred_check_branch
      %55 = sbr.rel (0) target = $region17
    $region16: #{tpu_custom_call.1} parent=1 // pred_region
      %57 = dma.done [#allocation4], 256
    $region17: #{tpu_custom_call.1} parent=1 // pred_fallthru
      _
    %58 = vsyncpa [#allocation3], 1
    %59 = vsyncpa [#allocation4], 1

</llo_original>
